<compile_context>
chip_gen: v5e
topology: v5e:2x2
jax: 0.10.0
libtpu: 0.0.40
codegen_flags: <defaults>
</compile_context>

<pallas_src>
import jax
import jax.numpy as jnp
from jax.experimental import pallas as pl
from jax.experimental.pallas import tpu as pltpu


# ----------------------------------------------------------------------------- helpers
def _round_up(a: int, b: int) -> int:
    return (a + b - 1) // b * b


def _sublane(dtype) -> int:
    # Minimum second-to-last (sublane) tile multiple: 8 for 4-byte, 16 for 2-byte,
    # 32 for 1-byte dtypes.
    return max(8, 32 // jnp.dtype(dtype).itemsize)


def _pick_tile(dim: int, target: int, unit: int) -> int:
    """Largest tile (multiple of `unit`, <= target) with small padding.

    Prefers a tile that exactly divides round_up(dim, unit) so `unit`-aligned dims need
    no per-call padding; falls back to the full target only if no divisor of at least
    half the target exists.
    """
    p = _round_up(dim, unit)
    t = min(_round_up(target, unit), p)
    cand = t
    while cand * 2 > t:
        if p % cand == 0:
            return cand
        cand -= unit
    return t


def _vmem_capacity_bytes() -> int:
    try:
        info = pltpu.get_tpu_info()
        cap = getattr(info, "vmem_capacity_bytes", None)
        if cap:
            return int(cap)
    except Exception:
        pass
    return 128 * 1024 * 1024  # v5e / v6e default


# ----------------------------------------------------------------------------- kernel
def _linear_add_add_kernel(x_ref, w_ref, b_ref, y_ref, z_ref, o_ref, acc_ref):
    # x_ref: [TM, TK]              activations tile
    # w_ref: [TK, TN]              weight tile (pre-transposed to [K, N] at init)
    # b_ref: [1, TN]   (float32)   bias row
    # y_ref, z_ref, o_ref: [TM, TN]
    # acc_ref: [TM, TN] float32    accumulator, resident across the K grid axis
    k = pl.program_id(2)

    @pl.when(k == 0)
    def _init():
        # Fold bias + y + z into the accumulator init: removes the zero-fill and the
        # 3-add epilogue from the finalize step (those tiles are resident at k==0).
        acc_ref[...] = (b_ref[...]
                        + y_ref[...].astype(jnp.float32)
                        + z_ref[...].astype(jnp.float32))

    x_t = x_ref[...]
    w_t = w_ref[...]
    if x_t.dtype != w_t.dtype:          # optional bf16 MXU path (weights prepped in bf16)
        x_t = x_t.astype(w_t.dtype)
    acc_ref[...] += jnp.dot(x_t, w_t, preferred_element_type=jnp.float32)

    @pl.when(k == pl.num_programs(2) - 1)
    def _store():
        o_ref[...] = acc_ref[...].astype(o_ref.dtype)


# ----------------------------------------------------------------------------- module
class LinearAddAdd:
    """Pallas-TPU fusion of _IPEXlinearAddAddCPU (dense path): linear(x) + y + z.

    Weight / bias preprocessing (transpose + tile padding + optional cast) happens once
    here, mirroring the PyTorch module's __init__.
    """

    def __init__(self, weight, bias=None, *, compute_dtype=None,
                 tm=512, tn=512, tk=1024):
        weight = jnp.asarray(weight)
        N, K = weight.shape                      # nn.Linear layout: [out, in]
        self.out_features, self.in_features = N, K

        # Generation-aware caps: v7x-class TensorCores have only 64 MiB of VMEM.
        vmem_cap = _vmem_capacity_bytes()
        if vmem_cap <= 64 * 1024 * 1024:         # v7x
            tm, tn, tk = min(tm, 512), min(tn, 512), min(tk, 1024)
            self._vmem_limit = 48 * 1024 * 1024
        else:                                    # v5e / v6e (128 MiB physical)
            self._vmem_limit = 64 * 1024 * 1024
        self._tm_target = max(8, tm)

        self._tn = _pick_tile(N, tn, 128)
        self._tk = _pick_tile(K, tk, 128)
        self._np = _round_up(N, self._tn)
        self._kp = _round_up(K, self._tk)

        # One-time weight prep: [N, K] -> [K, N] (canonical MXU layout, no per-step
        # in-kernel transpose), zero-pad to tile multiples, optional low-precision cast.
        w = weight
        if compute_dtype is not None:
            w = w.astype(compute_dtype)
        w = jnp.transpose(w)                                     # [K, N]
        self.weight_kn = jnp.pad(w, ((0, self._kp - K), (0, self._np - N)))

        if bias is None:
            bias = jnp.zeros((N,), dtype=jnp.float32)
        b = jnp.asarray(bias).reshape(1, N).astype(jnp.float32)
        self.bias_row = jnp.pad(b, ((0, 0), (0, self._np - N)))

    def __call__(self, x, y, z):
        *lead, K = x.shape
        assert K == self.in_features, "x last dim must equal in_features"
        N = self.out_features
        M = 1
        for d in lead:
            M *= d

        # Note: matches PyTorch's `linear(x) + y + z` promotion in the common case where
        # all operands share a dtype; mixed precision promotes via result_type.
        out_dtype = jnp.result_type(x.dtype, y.dtype, z.dtype)
        sub = max(_sublane(x.dtype), _sublane(y.dtype),
                  _sublane(z.dtype), _sublane(out_dtype))
        tm = _pick_tile(M, self._tm_target, sub)
        mp = _round_up(M, tm)
        tn, tk, np_, kp = self._tn, self._tk, self._np, self._kp

        x2 = x.reshape(M, K)
        y2 = y.reshape(M, N)
        z2 = z.reshape(M, N)
        # Alignment padding only for non-tile-aligned runtime shapes; production-aligned
        # shapes (and the prepped weight/bias) take the zero-copy path.
        if (mp, kp) != (M, K):
            x2 = jnp.pad(x2, ((0, mp - M), (0, kp - K)))
        if (mp, np_) != (M, N):
            y2 = jnp.pad(y2, ((0, mp - M), (0, np_ - N)))
            z2 = jnp.pad(z2, ((0, mp - M), (0, np_ - N)))

        grid = (mp // tm, np_ // tn, kp // tk)
        gm, gn, _ = grid

        # Truthful HBM-traffic estimate including tile re-streaming.
        bytes_accessed = int(
            x2.size * x2.dtype.itemsize * gn
            + self.weight_kn.size * self.weight_kn.dtype.itemsize * gm
            + self.bias_row.size * self.bias_row.dtype.itemsize * gm
            + y2.size * y2.dtype.itemsize
            + z2.size * z2.dtype.itemsize
            + mp * np_ * jnp.dtype(out_dtype).itemsize)

        out2 = pl.pallas_call(
            _linear_add_add_kernel,
            out_shape=jax.ShapeDtypeStruct((mp, np_), out_dtype),
            grid_spec=pltpu.PrefetchScalarGridSpec(
                num_scalar_prefetch=0,
                grid=grid,
                in_specs=[
                    pl.BlockSpec((tm, tk), lambda i, j, k: (i, k)),   # x tile
                    pl.BlockSpec((tk, tn), lambda i, j, k: (k, j)),   # weight tile [K,N]
                    pl.BlockSpec((1, tn), lambda i, j, k: (0, j)),    # bias row
                    pl.BlockSpec((tm, tn), lambda i, j, k: (i, j)),   # y tile (k-invariant)
                    pl.BlockSpec((tm, tn), lambda i, j, k: (i, j)),   # z tile (k-invariant)
                ],
                out_specs=pl.BlockSpec((tm, tn), lambda i, j, k: (i, j)),
                scratch_shapes=[pltpu.VMEM((tm, tn), jnp.float32)],
            ),
            compiler_params=pltpu.CompilerParams(
                dimension_semantics=("parallel", "parallel", "arbitrary"),
                vmem_limit_bytes=self._vmem_limit,
            ),
            cost_estimate=pl.CostEstimate(
                flops=2 * mp * np_ * kp,
                transcendentals=0,
                bytes_accessed=bytes_accessed,
            ),
        )(x2, self.weight_kn, self.bias_row, y2, z2)

        if (mp, np_) != (M, N):
            out2 = out2[:M, :N]
        return out2.reshape(*lead, N)


# ----------------------------------------------------------------------------- demo
if __name__ == "__main__":
    root_key = jax.random.PRNGKey(0)

    def run_case(batch, seq, in_features, out_features, **tiles):
        kx, ky, kz, kw, kb = jax.random.split(
            jax.random.fold_in(root_key, in_features * 131 + out_features), 5)
        x = jax.random.normal(kx, (batch, seq, in_features), dtype=jnp.float32)
        y = jax.random.normal(ky, (batch, seq, out_features), dtype=jnp.float32)
        z = jax.random.normal(kz, (batch, seq, out_features), dtype=jnp.float32)
        # nn.Linear(in_features, out_features): weight [out, in], bias [out]
        weight = jax.random.normal(kw, (out_features, in_features), dtype=jnp.float32) * 0.05
        bias = jax.random.normal(kb, (out_features,), dtype=jnp.float32) * 0.05

        fused = LinearAddAdd(weight, bias, **tiles)        # one-time prep (module init)
        out = jax.block_until_ready(fused(x, y, z))

        # Reference (plain JAX) — same semantics as self.linear(x) + y + z.
        ref = jnp.einsum("bsk,nk->bsn", x, weight) + bias + y + z
        assert out.shape == ref.shape, "shape mismatch vs reference"
        err = float(jnp.max(jnp.abs(out - ref)))
        assert jnp.allclose(out, ref, atol=2e-2, rtol=2e-2), f"mismatch vs reference: {err}"

    # Small shape consistent with the module (batch=2, seq=8, hidden=32 -> out=64).
    run_case(batch=2, seq=8, in_features=32, out_features=64)

    # Multi-tile M/N, 3-step K accumulation, K alignment padding (320 -> 384),
    # divisor-preferring tile selection (TM -> 96).
    run_case(batch=2, seq=96, in_features=320, out_features=384, tm=128, tn=128, tk=128)

    print("KERNEL_OK")
</pallas_src>

<mosaic_0001>
module attributes {stable_mosaic.version = 11 : i64} {
  func.func @_linear_add_add_kernel(%arg0: i32, %arg1: i32, %arg2: i32, %arg3: memref<16x128xf32, #tpu.memory_space<vmem>>, %arg4: memref<128x128xf32, #tpu.memory_space<vmem>>, %arg5: memref<1x128xf32, #tpu.memory_space<vmem>>, %arg6: memref<16x128xf32, #tpu.memory_space<vmem>>, %arg7: memref<16x128xf32, #tpu.memory_space<vmem>>, %arg8: memref<16x128xf32, #tpu.memory_space<vmem>>, %arg9: memref<16x128xf32, #tpu.memory_space<vmem>>) attributes {dimension_semantics = [#tpu.dimension_semantics<parallel>, #tpu.dimension_semantics<parallel>, #tpu.dimension_semantics<arbitrary>], iteration_bounds = array<i64: 1, 1, 1>, scalar_prefetch = 0 : i64, scratch_operands = 1 : i64, tpu.core_type = #tpu.core_type<tc>, window_params = [{transform_indices = @transform_0, window_bounds = array<i64: 16, 128>}, {transform_indices = @transform_1, window_bounds = array<i64: 128, 128>}, {transform_indices = @transform_2, window_bounds = array<i64: 1, 128>}, {transform_indices = @transform_3, window_bounds = array<i64: 16, 128>}, {transform_indices = @transform_4, window_bounds = array<i64: 16, 128>}, {transform_indices = @transform_5, window_bounds = array<i64: 16, 128>}]} {
    %c0_i32 = arith.constant 0 : i32
    %0 = arith.cmpi eq, %arg2, %c0_i32 : i32
    %1 = arith.extui %0 : i1 to i32
    %c0_i32_0 = arith.constant 0 : i32
    %2 = arith.cmpi ne, %1, %c0_i32_0 : i32
    scf.if %2 {
      %c0_10 = arith.constant 0 : index
      %c0_11 = arith.constant 0 : index
      %12 = vector.load %arg5[%c0_10, %c0_11] : memref<1x128xf32, #tpu.memory_space<vmem>>, vector<1x128xf32>
      %c0_12 = arith.constant 0 : index
      %c0_13 = arith.constant 0 : index
      %13 = vector.load %arg6[%c0_12, %c0_13] : memref<16x128xf32, #tpu.memory_space<vmem>>, vector<16x128xf32>
      %14 = vector.broadcast %12 : vector<1x128xf32> to vector<16x128xf32>
      %15 = arith.addf %14, %13 : vector<16x128xf32>
      %c0_14 = arith.constant 0 : index
      %c0_15 = arith.constant 0 : index
      %16 = vector.load %arg7[%c0_14, %c0_15] : memref<16x128xf32, #tpu.memory_space<vmem>>, vector<16x128xf32>
      %17 = arith.addf %15, %16 : vector<16x128xf32>
      %c0_16 = arith.constant 0 : index
      %c0_17 = arith.constant 0 : index
      %18 = vector.load %arg9[%c0_16, %c0_17] : memref<16x128xf32, #tpu.memory_space<vmem>>, vector<16x128xf32>
      tpu.vector_store %arg9[%c0_16, %c0_17], %17 {strides = array<i32>} : memref<16x128xf32, #tpu.memory_space<vmem>>, vector<16x128xf32>,
    } else {
    }
    %c0 = arith.constant 0 : index
    %c0_1 = arith.constant 0 : index
    %3 = vector.load %arg3[%c0, %c0_1] : memref<16x128xf32, #tpu.memory_space<vmem>>, vector<16x128xf32>
    %c0_2 = arith.constant 0 : index
    %c0_3 = arith.constant 0 : index
    %4 = vector.load %arg4[%c0_2, %c0_3] : memref<128x128xf32, #tpu.memory_space<vmem>>, vector<128x128xf32>
    %c0_4 = arith.constant 0 : index
    %c0_5 = arith.constant 0 : index
    %5 = vector.load %arg9[%c0_4, %c0_5] : memref<16x128xf32, #tpu.memory_space<vmem>>, vector<16x128xf32>
    %cst = arith.constant dense<0.000000e+00> : vector<16x128xf32>
    %6 = tpu.matmul %3, %4, %cst {dimension_numbers = #tpu.dot_dimension_numbers<[1], [0], [0], [1], [0, 0, 1, 1], [], []>} : vector<16x128xf32>, vector<128x128xf32>, vector<16x128xf32> -> vector<16x128xf32>
    %7 = arith.addf %5, %6 : vector<16x128xf32>
    %c0_6 = arith.constant 0 : index
    %c0_7 = arith.constant 0 : index
    %8 = vector.load %arg9[%c0_6, %c0_7] : memref<16x128xf32, #tpu.memory_space<vmem>>, vector<16x128xf32>
    tpu.vector_store %arg9[%c0_6, %c0_7], %7 {strides = array<i32>} : memref<16x128xf32, #tpu.memory_space<vmem>>, vector<16x128xf32>,
    %c0_i32_8 = arith.constant 0 : i32
    %9 = arith.cmpi eq, %arg2, %c0_i32_8 : i32
    %10 = arith.extui %9 : i1 to i32
    %c0_i32_9 = arith.constant 0 : i32
    %11 = arith.cmpi ne, %10, %c0_i32_9 : i32
    scf.if %11 {
      %c0_10 = arith.constant 0 : index
      %c0_11 = arith.constant 0 : index
      %12 = vector.load %arg9[%c0_10, %c0_11] : memref<16x128xf32, #tpu.memory_space<vmem>>, vector<16x128xf32>
      %c0_12 = arith.constant 0 : index
      %c0_13 = arith.constant 0 : index
      %13 = vector.load %arg8[%c0_12, %c0_13] : memref<16x128xf32, #tpu.memory_space<vmem>>, vector<16x128xf32>
      tpu.vector_store %arg8[%c0_12, %c0_13], %12 {strides = array<i32>} : memref<16x128xf32, #tpu.memory_space<vmem>>, vector<16x128xf32>,
    } else {
    }
    return
  }
  func.func @transform_0(%arg0: i32, %arg1: i32, %arg2: i32) -> (i32, i32) {
    %c0_i32 = arith.constant 0 : i32
    return %arg0, %arg2 : i32, i32
  }
  func.func @transform_1(%arg0: i32, %arg1: i32, %arg2: i32) -> (i32, i32) {
    %c0_i32 = arith.constant 0 : i32
    return %arg2, %arg1 : i32, i32
  }
  func.func @transform_2(%arg0: i32, %arg1: i32, %arg2: i32) -> (i32, i32) {
    %c0_i32 = arith.constant 0 : i32
    %c0_i32_0 = arith.constant 0 : i32
    return %c0_i32, %arg1 : i32, i32
  }
  func.func @transform_3(%arg0: i32, %arg1: i32, %arg2: i32) -> (i32, i32) {
    %c0_i32 = arith.constant 0 : i32
    return %arg0, %arg1 : i32, i32
  }
  func.func @transform_4(%arg0: i32, %arg1: i32, %arg2: i32) -> (i32, i32) {
    %c0_i32 = arith.constant 0 : i32
    return %arg0, %arg1 : i32, i32
  }
  func.func @transform_5(%arg0: i32, %arg1: i32, %arg2: i32) -> (i32, i32) {
    %c0_i32 = arith.constant 0 : i32
    return %arg0, %arg1 : i32, i32
  }
}

</mosaic_0001>

<llo_original>
// kernel: tpu_custom_call.1
$region0: #{tpu_custom_call.1}
  #allocation0 [shape = 'u32[]', space=smem, size = 0x4, offset = 0x4, fixed_abs, tag = 'smem constant byte address 0x4 - core index']
  #allocation1 [shape = 'u32[72,128]{1,0:T(1,128)}', space=vmem, size = 0x9000, scoped, tag = 'internal scratch']
  #allocation2 [shape = 'f32[16,128]{1,0:T(8,128)}', space=vmem, size = 0x2000, scoped, tag = 'scratch operand']
  %s0 = inlined_call_operand.hbm [shape: f32[16,128], index: 0, kind: input, shape index: {}]
  %s1 = inlined_call_operand.hbm [shape: f32[128,128], index: 1, kind: input, shape index: {}]
  %s2 = inlined_call_operand.vmem [shape: f32[1,128], index: 2, kind: input, shape index: {}]
  %s3 = inlined_call_operand.hbm [shape: f32[16,128], index: 3, kind: input, shape index: {}]
  %s4 = inlined_call_operand.hbm [shape: f32[16,128], index: 4, kind: input, shape index: {}]
  %s5 = inlined_call_operand.hbm [shape: f32[16,128], index: 5, kind: output, shape index: {}]
  %s6 = sld [smem:[#allocation0]]
  $region54: #{tpu_custom_call.1} parent=0
    _
  %s8 = ssub.s32 1, %s6
  %s9 = scalar_select 0, %s8, %s6
  $region1: #{tpu_custom_call.1} parent=0
    #allocation3 [shape = 'u8[8192]{0}', space=vmem, size = 0x2000, scoped, tag = 'input window, operand 0, single buffered']
    #allocation4 [shape = 's32[1]{0}', space=sflag, size = 0x4, scoped, tag = 'scoped memory for tpu_custom_call.1']
    #allocation5 [shape = 's32[1]{0}', space=sflag, size = 0x4, scoped, tag = 'scoped memory for tpu_custom_call.1']
    #allocation6 [shape = 'u8[65536]{0}', space=vmem, size = 0x10000, scoped, tag = 'input window, operand 1, single buffered']
    #allocation7 [shape = 's32[1]{0}', space=sflag, size = 0x4, scoped, tag = 'scoped memory for tpu_custom_call.1']
    #allocation8 [shape = 'u8[8192]{0}', space=vmem, size = 0x2000, scoped, tag = 'input window, operand 3, single buffered']
    #allocation9 [shape = 'u8[8192]{0}', space=vmem, size = 0x2000, scoped, tag = 'input window, operand 4, single buffered']
    #allocation10 [shape = 's32[1]{0}', space=sflag, size = 0x4, scoped, tag = 'scoped memory for tpu_custom_call.1']
    #allocation11 [shape = 'u8[8192]{0}', space=vmem, size = 0x2000, scoped, tag = 'output window, operand 0, single buffered']
    %10 = vsyncpa [#allocation4], 0
    %11 = vsyncpa [#allocation7], 0
    %12 = vsyncpa [#allocation10], 0
    %13 = vsyncpa [#allocation5], 0
    // Predicated region
    $region2: #{tpu_custom_call.1} parent=1 // pred_check
      _
    $region3: #{tpu_custom_call.1} parent=1 // pred_check_branch
      %15 = sbr.rel (0) target = $region5
    $region4: #{tpu_custom_call.1} parent=1 // pred_region
      %17 = vsyncadd [#allocation4], 0
      %s18 = sshll.u32 %s0, 4
      %s19 = int_to_ptr.hbm [resolvable:$true] %s18
      %s20 = sshll.u32 [#allocation3], 4
      %s21 = int_to_ptr.vmem [resolvable:$true] %s20
      %26 = dma.hbm_to_vmem [thread:$0]  %s19, 256, %s21, [#allocation4], 128, 128, 8
    $region5: #{tpu_custom_call.1} parent=1 // pred_fallthru
      _
    // Predicated region
    $region6: #{tpu_custom_call.1} parent=1 // pred_check
      _
    $region7: #{tpu_custom_call.1} parent=1 // pred_check_branch
      %28 = sbr.rel (0) target = $region9
    $region8: #{tpu_custom_call.1} parent=1 // pred_region
      %30 = vsyncadd [#allocation7], 0
      %s31 = sshll.u32 %s1, 4
      %s32 = int_to_ptr.hbm [resolvable:$true] %s31
      %s33 = sshll.u32 [#allocation6], 4
      %s34 = int_to_ptr.vmem [resolvable:$true] %s33
      %39 = dma.hbm_to_vmem [thread:$0]  %s32, 2048, %s34, [#allocation7], 128, 128, 8
    $region9: #{tpu_custom_call.1} parent=1 // pred_fallthru
      _
    // Predicated region
    $region10: #{tpu_custom_call.1} parent=1 // pred_check
      _
    $region11: #{tpu_custom_call.1} parent=1 // pred_check_branch
      %41 = sbr.rel (0) target = $region13
    $region12: #{tpu_custom_call.1} parent=1 // pred_region
      _
    $region13: #{tpu_custom_call.1} parent=1 // pred_fallthru
      _
    // Predicated region
    $region14: #{tpu_custom_call.1} parent=1 // pred_check
      _
    $region15: #{tpu_custom_call.1} parent=1 // pred_check_branch
      %43 = sbr.rel (0) target = $region17
    $region16: #{tpu_custom_call.1} parent=1 // pred_region
      %45 = vsyncadd [#allocation7], 0
      %s46 = sshll.u32 %s3, 4
      %s47 = int_to_ptr.hbm [resolvable:$true] %s46
      %s48 = sshll.u32 [#allocation8], 4
      %s49 = int_to_ptr.vmem [resolvable:$true] %s48
      %54 = dma.hbm_to_vmem [thread:$0]  %s47, 256, %s49, [#allocation7], 128, 128, 8
    $region17: #{tpu_custom_call.1} parent=1 // pred_fallthru
      _
    // Predicated region
    $region18: #{tpu_custom_call.1} parent=1 // pred_check
      _
    $region19: #{tpu_custom_call.1} parent=1 // pred_check_branch
      %56 = sbr.rel (0) target = $region21
    $region20: #{tpu_custom_call.1} parent=1 // pred_region
      %58 = vsyncadd [#allocation10], 0
      %s59 = sshll.u32 %s4, 4
      %s60 = int_to_ptr.hbm [resolvable:$true] %s59
      %s61 = sshll.u32 [#allocation9], 4
      %s62 = int_to_ptr.vmem [resolvable:$true] %s61
      %67 = dma.hbm_to_vmem [thread:$0]  %s60, 256, %s62, [#allocation10], 128, 128, 8
    $region21: #{tpu_custom_call.1} parent=1 // pred_fallthru
      _
    // Predicated region
    $region22: #{tpu_custom_call.1} parent=1 // pred_check
      _
    $region23: #{tpu_custom_call.1} parent=1 // pred_check_branch
      %69 = sbr.rel (0) target = $region25
    $region24: #{tpu_custom_call.1} parent=1 // pred_region
      %71 = dma.done [#allocation4], 256
    $region25: #{tpu_custom_call.1} parent=1 // pred_fallthru
      _
    // Predicated region
    $region26: #{tpu_custom_call.1} parent=1 // pred_check
      _
    $region27: #{tpu_custom_call.1} parent=1 // pred_check_branch
      %73 = sbr.rel (0) target = $region29
    $region28: #{tpu_custom_call.1} parent=1 // pred_region
      %75 = dma.done [#allocation7], 2048
    $region29: #{tpu_custom_call.1} parent=1 // pred_fallthru
      _
    // Predicated region
    $region30: #{tpu_custom_call.1} parent=1 // pred_check
      _
    $region31: #{tpu_custom_call.1} parent=1 // pred_check_branch
      %77 = sbr.rel (0) target = $region33
    $region32: #{tpu_custom_call.1} parent=1 // pred_region
      %79 = dma.done [#allocation7], 256
    $region33: #{tpu_custom_call.1} parent=1 // pred_fallthru
      _
    // Predicated region
    $region34: #{tpu_custom_call.1} parent=1 // pred_check
      _
    $region35: #{tpu_custom_call.1} parent=1 // pred_check_branch
      %81 = sbr.rel (0) target = $region37
    $region36: #{tpu_custom_call.1} parent=1 // pred_region
      %83 = dma.done [#allocation10], 256
    $region37: #{tpu_custom_call.1} parent=1 // pred_fallthru
      _
    %p84 = scmp.eq.s32.totalorder 0, 0
    // Predicated region
    $region38: #{tpu_custom_call.1} parent=1 // pred_check
      %p85 = pneg %p84
    $region39: #{tpu_custom_call.1} parent=1 // pred_check_branch
      %87 = sbr.rel (%p85) target = $region41
    $region40: #{tpu_custom_call.1} parent=1 // pred_region
      %v88 = vld [vmem:[%s2] sm:$0x1]
      %v89 = vld [vmem:[#allocation8] sm:$0xff]
      %v90 = vld [vmem:[#allocation8 + $0x8] sm:$0xff]
      %v92 = vperm.slane %v88, 0
      %v94 = vadd.f32 %v92, %v89
      %v95 = vadd.f32 %v92, %v90
      %v96 = vld [vmem:[#allocation9] sm:$0xff]
      %v97 = vld [vmem:[#allocation9 + $0x8] sm:$0xff]
      %v98 = vadd.f32 %v94, %v96
      %v99 = vadd.f32 %v95, %v97
      %100 = vst [vmem:[#allocation2] sm:$0xff] %v98
      %101 = vst [vmem:[#allocation2 + $0x8] sm:$0xff] %v99
    $region41: #{tpu_custom_call.1} parent=1 // pred_fallthru
      _
    %v102 = vld [vmem:[#allocation3] sm:$0xff]
    %v103 = vld [vmem:[#allocation3 + $0x8] sm:$0xff]
    %v104 = vld [vmem:[#allocation6] sm:$0xff]
    %v105 = vld [vmem:[#allocation6 + $0x8] sm:$0xff]
    %v106 = vld [vmem:[#allocation6 + $0x10] sm:$0xff]
    %v107 = vld [vmem:[#allocation6 + $0x18] sm:$0xff]
    %v108 = vld [vmem:[#allocation6 + $0x20] sm:$0xff]
    %v109 = vld [vmem:[#allocation6 + $0x28] sm:$0xff]
    %v110 = vld [vmem:[#allocation6 + $0x30] sm:$0xff]
    %v111 = vld [vmem:[#allocation6 + $0x38] sm:$0xff]
    %v112 = vld [vmem:[#allocation6 + $0x40] sm:$0xff]
    %v113 = vld [vmem:[#allocation6 + $0x48] sm:$0xff]
    %v114 = vld [vmem:[#allocation6 + $0x50] sm:$0xff]
    %v115 = vld [vmem:[#allocation6 + $0x58] sm:$0xff]
    %v116 = vld [vmem:[#allocation6 + $0x60] sm:$0xff]
    %v117 = vld [vmem:[#allocation6 + $0x68] sm:$0xff]
    %v118 = vld [vmem:[#allocation6 + $0x70] sm:$0xff]
    %v119 = vld [vmem:[#allocation6 + $0x78] sm:$0xff]
    %v120 = vld [vmem:[#allocation2] sm:$0xff]
    %v121 = vld [vmem:[#allocation2 + $0x8] sm:$0xff]
    %122 = vmatpush.msra.mxu0 %v119
    %123 = vmatpush.msra.mxu0 %v118
    %124 = vmatpush.msra.mxu0 %v117
    %125 = vmatpush.msra.mxu0 %v116
    %126 = vmatpush.msra.mxu0 %v115
    %127 = vmatpush.msra.mxu0 %v114
    %128 = vmatpush.msra.mxu0 %v113
    %129 = vmatpush.msra.mxu0 %v112
    %130 = vmatpush.msra.mxu0 %v111
    %131 = vmatpush.msra.mxu0 %v110
    %132 = vmatpush.msra.mxu0 %v109
    %133 = vmatpush.msra.mxu0 %v108
    %134 = vmatpush.msra.mxu0 %v107
    %135 = vmatpush.msra.mxu0 %v106
    %136 = vmatpush.msra.mxu0 %v105
    %137 = vmatpush.msra.mxu0 %v104
    %138 = vmatmul.f32.gmra.mxu0 %v102
    %v139 = vpop.f32.mrf.mxu0
    %v140 = vadd.f32 0.0, %v139
    %141 = vmatmul.f32.gmra.mxu0 %v103
    %v142 = vpop.f32.mrf.mxu0
    %v143 = vadd.f32 0.0, %v142
    %144 = vdwg.mxu0
    %v145 = vadd.f32 %v120, %v140
    %v146 = vadd.f32 %v121, %v143
    %147 = vst [vmem:[#allocation2] sm:$0xff] %v145
    %148 = vst [vmem:[#allocation2 + $0x8] sm:$0xff] %v146
    // Predicated region
    $region42: #{tpu_custom_call.1} parent=1 // pred_check
      %p149 = pneg %p84
    $region43: #{tpu_custom_call.1} parent=1 // pred_check_branch
      %151 = sbr.rel (%p149) target = $region45
    $region44: #{tpu_custom_call.1} parent=1 // pred_region
      %v152 = vld [vmem:[#allocation2] sm:$0xff]
      %v153 = vld [vmem:[#allocation2 + $0x8] sm:$0xff]
      %154 = vst [vmem:[#allocation11] sm:$0xff] %v152
      %155 = vst [vmem:[#allocation11 + $0x8] sm:$0xff] %v153
    $region45: #{tpu_custom_call.1} parent=1 // pred_fallthru
      _
    // Predicated region
    $region46: #{tpu_custom_call.1} parent=1 // pred_check
      _
    $region47: #{tpu_custom_call.1} parent=1 // pred_check_branch
      %157 = sbr.rel (0) target = $region49
    $region48: #{tpu_custom_call.1} parent=1 // pred_region
      %159 = vsyncadd [#allocation5], 0
      %s160 = sshll.u32 [#allocation11], 4
      %s161 = int_to_ptr.vmem [resolvable:$true] %s160
      %s162 = sshll.u32 %s5, 4
      %s163 = int_to_ptr.hbm [resolvable:$true] %s162
      %168 = dma.vmem_to_hbm [thread:$0]  %s161, 256, %s163, [#allocation5], 128, 128, 8
    $region49: #{tpu_custom_call.1} parent=1 // pred_fallthru
      _
    // Predicated region
    $region50: #{tpu_custom_call.1} parent=1 // pred_check
      _
    $region51: #{tpu_custom_call.1} parent=1 // pred_check_branch
      %170 = sbr.rel (0) target = $region53
    $region52: #{tpu_custom_call.1} parent=1 // pred_region
      %172 = dma.done [#allocation5], 256
    $region53: #{tpu_custom_call.1} parent=1 // pred_fallthru
      _
    %173 = vsyncpa [#allocation4], 1
    %174 = vsyncpa [#allocation7], 1
    %175 = vsyncpa [#allocation10], 1
    %176 = vsyncpa [#allocation5], 1

</llo_original>
